<compile_context>
chip_gen: v5e
topology: v5e:2x2
jax: 0.10.0
libtpu: 0.0.40
codegen_flags: <defaults>
</compile_context>

<pallas_src>
import functools

import jax
import jax.numpy as jnp
from jax.experimental import pallas as pl
from jax.experimental.pallas import tpu as pltpu


# ----------------------------- kernels --------------------------------------

def _fused_stats_norm_kernel(x_ref, o_ref, mean_ref, std_ref, inv_ref, *, eps):
    """One batch element (full L) x one V tile: stats + normalized output."""
    x = x_ref[...].astype(jnp.float32)                 # (1, L, TV)
    inv_L = 1.0 / x.shape[1]
    mean = jnp.sum(x, axis=1, keepdims=True) * inv_L   # (1, 1, TV)
    d = x - mean
    var = jnp.sum(d * d, axis=1, keepdims=True) * inv_L
    std = jnp.sqrt(var + eps)
    inv = 1.0 / std                                    # tiny: TV reciprocals
    o_ref[...] = (d * inv).astype(o_ref.dtype)
    mean_ref[...] = mean
    std_ref[...] = std
    inv_ref[...] = inv


def _stats_tiled_kernel(x_ref, mean_ref, std_ref, inv_ref, mean_sc, m2_sc,
                        *, eps, L, TL):
    """L-tiled statistics with Chan chunk-combine (no raw sum-of-squares)."""
    k = pl.program_id(1)

    @pl.when(k == 0)
    def _():
        mean_sc[...] = jnp.zeros_like(mean_sc)
        m2_sc[...] = jnp.zeros_like(m2_sc)

    x = x_ref[...].astype(jnp.float32)                 # (1, TL, V)
    rows_left = L - k * TL
    if L % TL == 0:
        n_b = float(TL)
    else:
        n_b = jnp.minimum(TL, rows_left).astype(jnp.float32)
        rid = jax.lax.broadcasted_iota(jnp.int32, x.shape, 1)
        x = jnp.where(rid < rows_left, x, 0.0)

    sum_b = jnp.sum(x, axis=1, keepdims=True)          # (1, 1, V)
    mean_b = sum_b / n_b
    d = x - mean_b
    if L % TL != 0:
        d = jnp.where(rid < rows_left, d, 0.0)
    m2_b = jnp.sum(d * d, axis=1, keepdims=True)

    # Chan combine of (mean_b, m2_b, n_b) into the running (mean_sc, m2_sc).
    n_a = (k * TL).astype(jnp.float32)
    n = n_a + n_b
    delta = mean_b - mean_sc[...]
    mean_sc[...] = mean_sc[...] + delta * (n_b / n)
    m2_sc[...] = m2_sc[...] + m2_b + delta * delta * (n_a * n_b / n)

    @pl.when(k == pl.num_programs(1) - 1)
    def _():
        var = m2_sc[...] * (1.0 / L)
        std = jnp.sqrt(var + eps)
        mean_ref[...] = mean_sc[...]
        std_ref[...] = std
        inv_ref[...] = 1.0 / std


def _norm_kernel(x_ref, m_ref, inv_ref, o_ref):
    x = x_ref[...].astype(jnp.float32)                 # (1, TL, Vp)
    o_ref[...] = ((x - m_ref[...]) * inv_ref[...]).astype(o_ref.dtype)


def _denorm_kernel(x_ref, m_ref, s_ref, o_ref):
    x = x_ref[...].astype(jnp.float32)
    o_ref[...] = (x * s_ref[...] + m_ref[...]).astype(o_ref.dtype)


# ----------------------------- tiling helpers --------------------------------

_ELEMWISE_TARGET_BYTES = 1 << 20       # ~1 MiB per x block (0.5-2 MiB sweet spot)
_FUSED_BLOCK_BYTES = 2 << 20           # cap for the full-L fused block


def _row_tile(L, lane, itemsize, target_bytes=_ELEMWISE_TARGET_BYTES):
    """Pick a sublane tile: ~target bytes, multiple of 8, or the full L."""
    rows = max(1, target_bytes // max(1, lane * itemsize))
    if rows >= L:
        return int(L)
    rows = max(8, (rows // 8) * 8)
    return int(min(rows, L))


def _maybe_pack(x):
    """(B, L, V) -> (B, L//g, g*V) when V < 128 divides 128 (free reshape)."""
    B, L, V = x.shape
    if V < 128 and 128 % V == 0:
        g = 128 // V
        if L % g == 0:
            return x.reshape(B, L // g, g * V), g
    return x, 1


# ----------------------------- wrappers --------------------------------------

def revin_stats(x, eps=1e-5):
    """mean, stdev, inv_stdev over dim 1 (float32), L-tiled & pipelined."""
    B, L, V = x.shape
    TL = _row_tile(L, V, x.dtype.itemsize)
    nL = pl.cdiv(L, TL)
    sspec = pl.BlockSpec((1, 1, V), lambda b, k: (b, 0, 0))
    mean, std, inv = pl.pallas_call(
        functools.partial(_stats_tiled_kernel, eps=float(eps), L=L, TL=TL),
        out_shape=(
            jax.ShapeDtypeStruct((B, 1, V), jnp.float32),
            jax.ShapeDtypeStruct((B, 1, V), jnp.float32),
            jax.ShapeDtypeStruct((B, 1, V), jnp.float32),
        ),
        grid=(B, nL),
        in_specs=[pl.BlockSpec((1, TL, V), lambda b, k: (b, k, 0))],
        out_specs=(sspec, sspec, sspec),
        scratch_shapes=[pltpu.VMEM((1, 1, V), jnp.float32),
                        pltpu.VMEM((1, 1, V), jnp.float32)],
        compiler_params=pltpu.CompilerParams(
            dimension_semantics=("parallel", "arbitrary")),
    )(x)
    return mean, std, inv


def _elementwise_call(kernel, x, stat_a, stat_b):
    B, L, V = x.shape
    TL = _row_tile(L, V, x.dtype.itemsize)
    xspec = pl.BlockSpec((1, TL, V), lambda b, k: (b, k, 0))
    sspec = pl.BlockSpec((1, 1, V), lambda b, k: (b, 0, 0))
    return pl.pallas_call(
        kernel,
        out_shape=jax.ShapeDtypeStruct((B, L, V), x.dtype),
        grid=(B, pl.cdiv(L, TL)),
        in_specs=[xspec, sspec, sspec],
        out_specs=xspec,
        compiler_params=pltpu.CompilerParams(
            dimension_semantics=("parallel", "parallel")),
    )(x, stat_a, stat_b)


def revin_normalize(x, mean, inv_std):
    V = x.shape[-1]
    mean = mean[..., :V].astype(jnp.float32)        # torch: self.mean[..., :V]
    inv_std = inv_std[..., :V].astype(jnp.float32)
    xp, g = _maybe_pack(x)
    if g > 1:  # lane-dense layout: tile the tiny stats to match (pure XLA, tiny)
        mean = jnp.tile(mean, (1, 1, g))
        inv_std = jnp.tile(inv_std, (1, 1, g))
    out = _elementwise_call(_norm_kernel, xp, mean, inv_std)
    return out.reshape(x.shape)


def revin_denormalize(x, mean, stdev):
    V = x.shape[-1]
    mean = mean[..., :V].astype(jnp.float32)
    stdev = stdev[..., :V].astype(jnp.float32)
    xp, g = _maybe_pack(x)
    if g > 1:
        mean = jnp.tile(mean, (1, 1, g))
        stdev = jnp.tile(stdev, (1, 1, g))
    out = _elementwise_call(_denorm_kernel, xp, mean, stdev)
    return out.reshape(x.shape)


def revin_stats_normalize(x, eps=1e-5):
    """Fused stats+normalize: one HBM read + one write of x when it fits."""
    B, L, V = x.shape
    if V <= 128:
        TV = V
    else:
        lanes = max(128, (_FUSED_BLOCK_BYTES // (L * 4)) // 128 * 128)
        TV = int(min(V, lanes))
    if L * TV * 4 > _FUSED_BLOCK_BYTES:
        # Full-length column block would not fit the VMEM budget (double
        # buffered in + out): fall back to tiled stats then tiled normalize,
        # which is minimal traffic (2R + 1W) when x cannot stay resident.
        mean, std, inv = revin_stats(x, eps)
        return revin_normalize(x, mean, inv), mean, std, inv

    xspec = pl.BlockSpec((1, L, TV), lambda b, j: (b, 0, j))
    sspec = pl.BlockSpec((1, 1, TV), lambda b, j: (b, 0, j))
    out, mean, std, inv = pl.pallas_call(
        functools.partial(_fused_stats_norm_kernel, eps=float(eps)),
        out_shape=(
            jax.ShapeDtypeStruct((B, L, V), x.dtype),
            jax.ShapeDtypeStruct((B, 1, V), jnp.float32),
            jax.ShapeDtypeStruct((B, 1, V), jnp.float32),
            jax.ShapeDtypeStruct((B, 1, V), jnp.float32),
        ),
        grid=(B, pl.cdiv(V, TV)),
        in_specs=[xspec],
        out_specs=(xspec, sspec, sspec, sspec),
        compiler_params=pltpu.CompilerParams(
            dimension_semantics=("parallel", "parallel")),
    )(x)
    return out, mean, std, inv


class RevIN:
    """JAX/Pallas port of the PyTorch RevIN module (forward semantics)."""

    def __init__(self, eps=1e-5):
        self.eps = eps
        self.mean = None
        self.stdev = None
        self.inv_stdev = None

    def __call__(self, x, mode: str):
        if mode == "stats":
            self.mean, self.stdev, self.inv_stdev = revin_stats(x, self.eps)
            return x
        elif mode == "norm":
            return revin_normalize(x, self.mean, self.inv_stdev)
        elif mode == "denorm":
            return revin_denormalize(x, self.mean, self.stdev)
        else:
            raise NotImplementedError

    def stats_and_normalize(self, x):
        """Fused fast path: stats + normalize with a single HBM read of x."""
        out, self.mean, self.stdev, self.inv_stdev = revin_stats_normalize(
            x, self.eps)
        return out


# ----------------------------- demo / self-check -----------------------------

if __name__ == "__main__":
    key = jax.random.PRNGKey(0)
    B, L, V = 2, 8, 32
    x = jax.random.normal(key, (B, L, V), dtype=jnp.float32) * 3.0 + 1.5

    # Reference (plain JAX, matching torch mean / unbiased=False var).
    mean_ref = jnp.mean(x, axis=1, keepdims=True)
    var_ref = jnp.mean((x - mean_ref) ** 2, axis=1, keepdims=True)
    std_ref = jnp.sqrt(var_ref + 1e-5)
    norm_ref = (x - mean_ref) / std_ref

    # Mode-based API (matches the PyTorch module's forward).
    revin = RevIN(eps=1e-5)
    revin(x, "stats")
    x_norm = revin(x, "norm")
    x_denorm = revin(x_norm, "denorm")

    # Fused fast path (stats + norm in a single pass over x).
    revin_f = RevIN(eps=1e-5)
    x_norm_fused = revin_f.stats_and_normalize(x)

    jax.block_until_ready(
        (revin.mean, revin.stdev, x_norm, x_denorm, x_norm_fused))

    assert jnp.allclose(revin.mean, mean_ref, atol=1e-5), "mean mismatch"
    assert jnp.allclose(revin.stdev, std_ref, atol=1e-5), "stdev mismatch"
    assert jnp.allclose(x_norm, norm_ref, atol=1e-5), "norm mismatch"
    assert jnp.allclose(revin_f.mean, mean_ref, atol=1e-5), "fused mean mismatch"
    assert jnp.allclose(revin_f.stdev, std_ref, atol=1e-5), "fused stdev mismatch"
    assert jnp.allclose(x_norm_fused, norm_ref, atol=1e-5), "fused norm mismatch"
    assert jnp.allclose(x_denorm, x, atol=1e-4), "denorm roundtrip mismatch"

    print("KERNEL_OK")
</pallas_src>

<mosaic_0001>
module attributes {stable_mosaic.version = 11 : i64} {
  func.func @_stats_tiled_kernel(%arg0: i32, %arg1: i32, %arg2: memref<1x8x32xf32, #tpu.memory_space<vmem>>, %arg3: memref<1x1x32xf32, #tpu.memory_space<vmem>>, %arg4: memref<1x1x32xf32, #tpu.memory_space<vmem>>, %arg5: memref<1x1x32xf32, #tpu.memory_space<vmem>>, %arg6: memref<1x1x32xf32, #tpu.memory_space<vmem>>, %arg7: memref<1x1x32xf32, #tpu.memory_space<vmem>>) attributes {dimension_semantics = [#tpu.dimension_semantics<parallel>, #tpu.dimension_semantics<arbitrary>], iteration_bounds = array<i64: 2, 1>, scalar_prefetch = 0 : i64, scratch_operands = 2 : i64, tpu.core_type = #tpu.core_type<tc>, window_params = [{transform_indices = @transform_0, window_bounds = array<i64: 1, 8, 32>}, {transform_indices = @transform_1, window_bounds = array<i64: 1, 1, 32>}, {transform_indices = @transform_2, window_bounds = array<i64: 1, 1, 32>}, {transform_indices = @transform_3, window_bounds = array<i64: 1, 1, 32>}]} {
    %c0_i32 = arith.constant 0 : i32
    %0 = arith.cmpi eq, %arg1, %c0_i32 : i32
    %1 = arith.extui %0 : i1 to i32
    %c0_i32_0 = arith.constant 0 : i32
    %2 = arith.cmpi ne, %1, %c0_i32_0 : i32
    scf.if %2 {
      %cst_25 = arith.constant 0.000000e+00 : f32
      %36 = vector.broadcast %cst_25 : f32 to vector<1x1x32xf32>
      %c0_26 = arith.constant 0 : index
      %c0_27 = arith.constant 0 : index
      %c0_28 = arith.constant 0 : index
      %37 = vector.load %arg6[%c0_26, %c0_27, %c0_28] : memref<1x1x32xf32, #tpu.memory_space<vmem>>, vector<1x1x32xf32>
      tpu.vector_store %arg6[%c0_26, %c0_27, %c0_28], %36 {strides = array<i32>} : memref<1x1x32xf32, #tpu.memory_space<vmem>>, vector<1x1x32xf32>,
      %cst_29 = arith.constant 0.000000e+00 : f32
      %38 = vector.broadcast %cst_29 : f32 to vector<1x1x32xf32>
      %c0_30 = arith.constant 0 : index
      %c0_31 = arith.constant 0 : index
      %c0_32 = arith.constant 0 : index
      %39 = vector.load %arg7[%c0_30, %c0_31, %c0_32] : memref<1x1x32xf32, #tpu.memory_space<vmem>>, vector<1x1x32xf32>
      tpu.vector_store %arg7[%c0_30, %c0_31, %c0_32], %38 {strides = array<i32>} : memref<1x1x32xf32, #tpu.memory_space<vmem>>, vector<1x1x32xf32>,
    } else {
    }
    %c0 = arith.constant 0 : index
    %c0_1 = arith.constant 0 : index
    %c0_2 = arith.constant 0 : index
    %3 = vector.load %arg2[%c0, %c0_1, %c0_2] : memref<1x8x32xf32, #tpu.memory_space<vmem>>, vector<1x8x32xf32>
    %cst = arith.constant dense<0.000000e+00> : vector<1x32xf32>
    %4 = vector.multi_reduction <add>, %3, %cst [1] : vector<1x8x32xf32> to vector<1x32xf32>
    %5 = vector.shape_cast %4 : vector<1x32xf32> to vector<1x1x32xf32>
    %cst_3 = arith.constant 8.000000e+00 : f32
    %6 = vector.broadcast %cst_3 : f32 to vector<1x1x32xf32>
    %7 = arith.divf %5, %6 : vector<1x1x32xf32>
    %8 = vector.broadcast %7 : vector<1x1x32xf32> to vector<1x8x32xf32>
    %9 = arith.subf %3, %8 : vector<1x8x32xf32>
    %10 = arith.mulf %9, %9 : vector<1x8x32xf32>
    %cst_4 = arith.constant dense<0.000000e+00> : vector<1x32xf32>
    %11 = vector.multi_reduction <add>, %10, %cst_4 [1] : vector<1x8x32xf32> to vector<1x32xf32>
    %12 = vector.shape_cast %11 : vector<1x32xf32> to vector<1x1x32xf32>
    %c8_i32 = arith.constant 8 : i32
    %13 = arith.muli %arg1, %c8_i32 : i32
    %14 = arith.sitofp %13 : i32 to f32
    %cst_5 = arith.constant 8.000000e+00 : f32
    %15 = arith.addf %14, %cst_5 : f32
    %c0_6 = arith.constant 0 : index
    %c0_7 = arith.constant 0 : index
    %c0_8 = arith.constant 0 : index
    %16 = vector.load %arg6[%c0_6, %c0_7, %c0_8] : memref<1x1x32xf32, #tpu.memory_space<vmem>>, vector<1x1x32xf32>
    %17 = arith.subf %7, %16 : vector<1x1x32xf32>
    %c0_9 = arith.constant 0 : index
    %c0_10 = arith.constant 0 : index
    %c0_11 = arith.constant 0 : index
    %18 = vector.load %arg6[%c0_9, %c0_10, %c0_11] : memref<1x1x32xf32, #tpu.memory_space<vmem>>, vector<1x1x32xf32>
    %cst_12 = arith.constant 8.000000e+00 : f32
    %19 = arith.divf %cst_12, %15 : f32
    %20 = vector.broadcast %19 : f32 to vector<1x1x32xf32>
    %21 = arith.mulf %17, %20 : vector<1x1x32xf32>
    %22 = arith.addf %18, %21 : vector<1x1x32xf32>
    %c0_13 = arith.constant 0 : index
    %c0_14 = arith.constant 0 : index
    %c0_15 = arith.constant 0 : index
    %23 = vector.load %arg6[%c0_13, %c0_14, %c0_15] : memref<1x1x32xf32, #tpu.memory_space<vmem>>, vector<1x1x32xf32>
    tpu.vector_store %arg6[%c0_13, %c0_14, %c0_15], %22 {strides = array<i32>} : memref<1x1x32xf32, #tpu.memory_space<vmem>>, vector<1x1x32xf32>,
    %c0_16 = arith.constant 0 : index
    %c0_17 = arith.constant 0 : index
    %c0_18 = arith.constant 0 : index
    %24 = vector.load %arg7[%c0_16, %c0_17, %c0_18] : memref<1x1x32xf32, #tpu.memory_space<vmem>>, vector<1x1x32xf32>
    %25 = arith.addf %24, %12 : vector<1x1x32xf32>
    %26 = arith.mulf %17, %17 : vector<1x1x32xf32>
    %cst_19 = arith.constant 8.000000e+00 : f32
    %27 = arith.mulf %14, %cst_19 : f32
    %28 = arith.divf %27, %15 : f32
    %29 = vector.broadcast %28 : f32 to vector<1x1x32xf32>
    %30 = arith.mulf %26, %29 : vector<1x1x32xf32>
    %31 = arith.addf %25, %30 : vector<1x1x32xf32>
    %c0_20 = arith.constant 0 : index
    %c0_21 = arith.constant 0 : index
    %c0_22 = arith.constant 0 : index
    %32 = vector.load %arg7[%c0_20, %c0_21, %c0_22] : memref<1x1x32xf32, #tpu.memory_space<vmem>>, vector<1x1x32xf32>
    tpu.vector_store %arg7[%c0_20, %c0_21, %c0_22], %31 {strides = array<i32>} : memref<1x1x32xf32, #tpu.memory_space<vmem>>, vector<1x1x32xf32>,
    %c0_i32_23 = arith.constant 0 : i32
    %33 = arith.cmpi eq, %arg1, %c0_i32_23 : i32
    %34 = arith.extui %33 : i1 to i32
    %c0_i32_24 = arith.constant 0 : i32
    %35 = arith.cmpi ne, %34, %c0_i32_24 : i32
    scf.if %35 {
      %c0_25 = arith.constant 0 : index
      %c0_26 = arith.constant 0 : index
      %c0_27 = arith.constant 0 : index
      %36 = vector.load %arg7[%c0_25, %c0_26, %c0_27] : memref<1x1x32xf32, #tpu.memory_space<vmem>>, vector<1x1x32xf32>
      %cst_28 = arith.constant 1.250000e-01 : f32
      %37 = vector.broadcast %cst_28 : f32 to vector<1x1x32xf32>
      %38 = arith.mulf %36, %37 : vector<1x1x32xf32>
      %cst_29 = arith.constant 9.99999974E-6 : f32
      %39 = vector.broadcast %cst_29 : f32 to vector<1x1x32xf32>
      %40 = arith.addf %38, %39 : vector<1x1x32xf32>
      %41 = math.sqrt %40 : vector<1x1x32xf32>
      %c0_30 = arith.constant 0 : index
      %c0_31 = arith.constant 0 : index
      %c0_32 = arith.constant 0 : index
      %42 = vector.load %arg6[%c0_30, %c0_31, %c0_32] : memref<1x1x32xf32, #tpu.memory_space<vmem>>, vector<1x1x32xf32>
      %c0_33 = arith.constant 0 : index
      %c0_34 = arith.constant 0 : index
      %c0_35 = arith.constant 0 : index
      %43 = vector.load %arg3[%c0_33, %c0_34, %c0_35] : memref<1x1x32xf32, #tpu.memory_space<vmem>>, vector<1x1x32xf32>
      tpu.vector_store %arg3[%c0_33, %c0_34, %c0_35], %42 {strides = array<i32>} : memref<1x1x32xf32, #tpu.memory_space<vmem>>, vector<1x1x32xf32>,
      %c0_36 = arith.constant 0 : index
      %c0_37 = arith.constant 0 : index
      %c0_38 = arith.constant 0 : index
      %44 = vector.load %arg4[%c0_36, %c0_37, %c0_38] : memref<1x1x32xf32, #tpu.memory_space<vmem>>, vector<1x1x32xf32>
      tpu.vector_store %arg4[%c0_36, %c0_37, %c0_38], %41 {strides = array<i32>} : memref<1x1x32xf32, #tpu.memory_space<vmem>>, vector<1x1x32xf32>,
      %cst_39 = arith.constant 1.000000e+00 : f32
      %45 = vector.broadcast %cst_39 : f32 to vector<1x1x32xf32>
      %46 = arith.divf %45, %41 : vector<1x1x32xf32>
      %c0_40 = arith.constant 0 : index
      %c0_41 = arith.constant 0 : index
      %c0_42 = arith.constant 0 : index
      %47 = vector.load %arg5[%c0_40, %c0_41, %c0_42] : memref<1x1x32xf32, #tpu.memory_space<vmem>>, vector<1x1x32xf32>
      tpu.vector_store %arg5[%c0_40, %c0_41, %c0_42], %46 {strides = array<i32>} : memref<1x1x32xf32, #tpu.memory_space<vmem>>, vector<1x1x32xf32>,
    } else {
    }
    return
  }
  func.func @transform_0(%arg0: i32, %arg1: i32) -> (i32, i32, i32) {
    %c0_i32 = arith.constant 0 : i32
    %c0_i32_0 = arith.constant 0 : i32
    return %arg0, %arg1, %c0_i32 : i32, i32, i32
  }
  func.func @transform_1(%arg0: i32, %arg1: i32) -> (i32, i32, i32) {
    %c0_i32 = arith.constant 0 : i32
    %c0_i32_0 = arith.constant 0 : i32
    %c0_i32_1 = arith.constant 0 : i32
    return %arg0, %c0_i32, %c0_i32_0 : i32, i32, i32
  }
  func.func @transform_2(%arg0: i32, %arg1: i32) -> (i32, i32, i32) {
    %c0_i32 = arith.constant 0 : i32
    %c0_i32_0 = arith.constant 0 : i32
    %c0_i32_1 = arith.constant 0 : i32
    return %arg0, %c0_i32, %c0_i32_0 : i32, i32, i32
  }
  func.func @transform_3(%arg0: i32, %arg1: i32) -> (i32, i32, i32) {
    %c0_i32 = arith.constant 0 : i32
    %c0_i32_0 = arith.constant 0 : i32
    %c0_i32_1 = arith.constant 0 : i32
    return %arg0, %c0_i32, %c0_i32_0 : i32, i32, i32
  }
}

</mosaic_0001>

<llo_original>
// kernel: tpu_custom_call.1
$region0: #{tpu_custom_call.1}
  #allocation0 [shape = 'u32[]', space=smem, size = 0x4, offset = 0x4, fixed_abs, tag = 'smem constant byte address 0x4 - core index']
  #allocation1 [shape = 'u32[72,128]{1,0:T(1,128)}', space=vmem, size = 0x9000, scoped, tag = 'internal scratch']
  #allocation2 [shape = 'f32[1,1,32]{2,1,0:T(1,128)}', space=vmem, size = 0x200, scoped, tag = 'scratch operand']
  #allocation3 [shape = 'f32[1,1,32]{2,1,0:T(1,128)}', space=vmem, size = 0x200, scoped, tag = 'scratch operand']
  %s0 = inlined_call_operand.hbm [shape: f32[2,8,32], index: 0, kind: input, shape index: {}]
  %s1 = inlined_call_operand.hbm [shape: f32[2,1,32], index: 1, kind: output, shape index: {0}]
  %s2 = inlined_call_operand.hbm [shape: f32[2,1,32], index: 2, kind: output, shape index: {1}]
  %s3 = inlined_call_operand.hbm [shape: f32[2,1,32], index: 3, kind: output, shape index: {2}]
  %4 = xla_tuple %s1, %s2, %s3
  %s5 = sld [smem:[#allocation0]]
  $region65: #{tpu_custom_call.1} parent=0
    _
  %s7 = ssub.s32 1, %s5
  %s8 = scalar_select 0, %s7, %s5
  $region1: #{tpu_custom_call.1} parent=0
    #allocation4 [shape = 'u8[8192]{0}', space=vmem, size = 0x2000, scoped, tag = 'input window, operand 0']
    #allocation5 [shape = 's32[2]{0}', space=sflag, size = 0x8, scoped, tag = 'scoped memory for tpu_custom_call.1']
    #allocation6 [shape = 's32[2]{0}', space=sflag, size = 0x8, scoped, tag = 'scoped memory for tpu_custom_call.1']
    #allocation7 [shape = 'u8[1024]{0}', space=vmem, size = 0x400, scoped, tag = 'output window, operand 0']
    #allocation8 [shape = 'u8[1024]{0}', space=vmem, size = 0x400, scoped, tag = 'output window, operand 1']
    #allocation9 [shape = 's32[2]{0}', space=sflag, size = 0x8, scoped, tag = 'scoped memory for tpu_custom_call.1']
    #allocation10 [shape = 'u8[1024]{0}', space=vmem, size = 0x400, scoped, tag = 'output window, operand 2']
    %9 = vsyncpa [#allocation5], 0
    %s10 = scalar_lea.sflag [#allocation5], 1
    %11 = vsyncpa %s10, 0
    %12 = vsyncpa [#allocation6], 0
    %s13 = scalar_lea.sflag [#allocation6], 1
    %14 = vsyncpa %s13, 0
    %15 = vsyncpa [#allocation9], 0
    %s16 = scalar_lea.sflag [#allocation9], 1
    %17 = vsyncpa %s16, 0
    loop: start=0, step=1, limit=4
    $region2: #{tpu_custom_call.1} parent=1 // loop_pre_header
      _
    $region3: #{tpu_custom_call.1} parent=1 // loop_header
      %s19 = sphi 0, %s23
      %p20 = scmp.ge.s32.totalorder %s19, 4
      %s26 = sphi 0, %s38
      %s27 = sphi 0, %s34
      %s28 = sphi 0, %s26
      %s29 = sphi 0, %s27
      %s30 = sphi 0, %s28
      %s31 = sphi 0, %s29
      %s43 = sphi 0, %s45
      %s46 = sphi 0, %s43
      %s47 = sphi 0, %s46
      %s63 = sphi 0, %s47
      %s69 = sphi 0, %s71
      %s72 = sphi 0, %s69
      %s73 = sphi 0, %s72
      %s89 = sphi 0, %s73
      %s95 = sphi 0, %s97
      %s98 = sphi 0, %s95
      %s99 = sphi 0, %s98
      %s115 = sphi 0, %s99
      %s121 = sphi 0, %s123
      %s124 = sphi 0, %s121
      %s125 = sphi 0, %s124
      %s141 = sphi 0, %s125
    $region4: #{tpu_custom_call.1} parent=1 // loop_header_branch
      %22 = sbr.rel (%p20) target = $region8
    $region5: #{tpu_custom_call.1} parent=1 // loop_body
      %s24 = ssub.s32 %s19, 1
      %s25 = ssub.s32 %s19, 2
      %s32 = sadd.s32 1, %s27
      %p33 = scmp.ge.s32.totalorder %s32, 1
      %s34 = scalar_select %p33, 0, %s32
      %s35 = sadd.s32 1, %s26
      %s36 = scalar_select %p33, %s35, %s26
      %p37 = scmp.ge.s32.totalorder %s36, 2
      %s38 = scalar_select %p37, 0, %s36
      %s39 = ssub.s32 %s26, %s38
      %s40 = ssub.s32 %s27, %s34
      %s41 = sor.u32 %s39, %s40
      %p42 = scmp.eq.s32.totalorder %s41, 0
      %s44 = sadd.s32 %s43, 1
      %s45 = scalar_select %p42, %s43, %s44
      %p48 = pneg %p42
      %p49 = scmp.eq.s32.totalorder %s19, 1
      %p50 = por %p48, %p49
      %p51 = scmp.ne.s32.totalorder %s43, %s46
      %p52 = scmp.eq.s32.totalorder %s19, 0
      %p53 = por %p51, %p52
      %p54 = scmp.ne.s32.totalorder %s43, %s46
      %p55 = scmp.eq.s32.totalorder %s24, 1
      %p56 = por %p54, %p55
      %p57 = scmp.ne.s32.totalorder %s46, %s47
      %p58 = scmp.eq.s32.totalorder %s24, 0
      %p59 = por %p57, %p58
      %p60 = scmp.ne.s32.totalorder %s46, %s47
      %p61 = scmp.eq.s32.totalorder %s25, 1
      %p62 = por %p60, %p61
      %p64 = scmp.ne.s32.totalorder %s47, %s63
      %p65 = scmp.eq.s32.totalorder %s25, 0
      %p66 = por %p64, %p65
      %s67 = ssub.s32 %s26, %s38
      %p68 = scmp.eq.s32.totalorder %s67, 0
      %s70 = sadd.s32 %s69, 1
      %s71 = scalar_select %p68, %s69, %s70
      %p74 = pneg %p68
      %p75 = scmp.eq.s32.totalorder %s19, 1
      %p76 = por %p74, %p75
      %p77 = scmp.ne.s32.totalorder %s69, %s72
      %p78 = scmp.eq.s32.totalorder %s19, 0
      %p79 = por %p77, %p78
      %p80 = scmp.ne.s32.totalorder %s69, %s72
      %p81 = scmp.eq.s32.totalorder %s24, 1
      %p82 = por %p80, %p81
      %p83 = scmp.ne.s32.totalorder %s72, %s73
      %p84 = scmp.eq.s32.totalorder %s24, 0
      %p85 = por %p83, %p84
      %p86 = scmp.ne.s32.totalorder %s72, %s73
      %p87 = scmp.eq.s32.totalorder %s25, 1
      %p88 = por %p86, %p87
      %p90 = scmp.ne.s32.totalorder %s73, %s89
      %p91 = scmp.eq.s32.totalorder %s25, 0
      %p92 = por %p90, %p91
      %s93 = ssub.s32 %s26, %s38
      %p94 = scmp.eq.s32.totalorder %s93, 0
      %s96 = sadd.s32 %s95, 1
      %s97 = scalar_select %p94, %s95, %s96
      %p100 = pneg %p94
      %p101 = scmp.eq.s32.totalorder %s19, 1
      %p102 = por %p100, %p101
      %p103 = scmp.ne.s32.totalorder %s95, %s98
      %p104 = scmp.eq.s32.totalorder %s19, 0
      %p105 = por %p103, %p104
      %p106 = scmp.ne.s32.totalorder %s95, %s98
      %p107 = scmp.eq.s32.totalorder %s24, 1
      %p108 = por %p106, %p107
      %p109 = scmp.ne.s32.totalorder %s98, %s99
      %p110 = scmp.eq.s32.totalorder %s24, 0
      %p111 = por %p109, %p110
      %p112 = scmp.ne.s32.totalorder %s98, %s99
      %p113 = scmp.eq.s32.totalorder %s25, 1
      %p114 = por %p112, %p113
      %p116 = scmp.ne.s32.totalorder %s99, %s115
      %p117 = scmp.eq.s32.totalorder %s25, 0
      %p118 = por %p116, %p117
      %s119 = ssub.s32 %s26, %s38
      %p120 = scmp.eq.s32.totalorder %s119, 0
      %s122 = sadd.s32 %s121, 1
      %s123 = scalar_select %p120, %s121, %s122
      %p126 = pneg %p120
      %p127 = scmp.eq.s32.totalorder %s19, 1
      %p128 = por %p126, %p127
      %p129 = scmp.ne.s32.totalorder %s121, %s124
      %p130 = scmp.eq.s32.totalorder %s19, 0
      %p131 = por %p129, %p130
      %p132 = scmp.ne.s32.totalorder %s121, %s124
      %p133 = scmp.eq.s32.totalorder %s24, 1
      %p134 = por %p132, %p133
      %p135 = scmp.ne.s32.totalorder %s124, %s125
      %p136 = scmp.eq.s32.totalorder %s24, 0
      %p137 = por %p135, %p136
      %p138 = scmp.ne.s32.totalorder %s124, %s125
      %p139 = scmp.eq.s32.totalorder %s25, 1
      %p140 = por %p138, %p139
      %p142 = scmp.ne.s32.totalorder %s125, %s141
      %p143 = scmp.eq.s32.totalorder %s25, 0
      %p144 = por %p142, %p143
      %p145 = scmp.le.s32.totalorder 1, %s19
      %p146 = scmp.lt.s32.totalorder %s19, 3
      %p147 = pnand %p145, %p146
      %p148 = pneg %p147
      // Predicated region
      $region9: #{tpu_custom_call.1} parent=5 // pred_check
        _
      $region10: #{tpu_custom_call.1} parent=5 // pred_check_branch
        %150 = sbr.rel (%p147) target = $region12
      $region11: #{tpu_custom_call.1} parent=5 // pred_region
        %s151 = ssub.s32 %s19, 1
      $region12: #{tpu_custom_call.1} parent=5 // pred_fallthru
        _
      %p152 = scmp.lt.s32.totalorder %s19, 2
      // Predicated region
      $region13: #{tpu_custom_call.1} parent=5 // pred_check
        %p153 = pneg %p152
      $region14: #{tpu_custom_call.1} parent=5 // pred_check_branch
        %155 = sbr.rel (%p153) target = $region16
      $region15: #{tpu_custom_call.1} parent=5 // pred_region
        // Predicated region
        $region17: #{tpu_custom_call.1} parent=15 // pred_check
          %p156 = pneg %p53
        $region18: #{tpu_custom_call.1} parent=15 // pred_check_branch
          %158 = sbr.rel (%p156) target = $region20
        $region19: #{tpu_custom_call.1} parent=15 // pred_region
          %s159 = sand.u32 %s43, 1
          %s160 = scalar_lea.sflag [#allocation5], %s159
          %s161 = sand.u32 %s43, 1
          %s162 = smul.addr %s161, 8
          %s163 = scalar_lea.vmem [#allocation4], %s162
          %165 = vsyncadd %s160, 0
          %s166 = sadd.s32 %s27, %s26
          %s167 = smul.addr %s166, 8
          %s168 = scalar_lea.hbm %s0, %s167
          %s170 = sshll.u32 %s168, 4
          %s171 = int_to_ptr.hbm [resolvable:$true] %s170
          %s172 = sshll.u32 %s163, 4
          %s173 = int_to_ptr.vmem [resolvable:$true] %s172
          %175 = dma.hbm_to_vmem [thread:$0]  %s171, 128, %s173, %s160
        $region20: #{tpu_custom_call.1} parent=15 // pred_fallthru
          _
      $region16: #{tpu_custom_call.1} parent=5 // pred_fallthru
        _
      %p176 = scmp.le.s32.totalorder 1, %s19
      %p177 = scmp.lt.s32.totalorder %s19, 3
      %p178 = pnand %p176, %p177
      %p179 = pneg %p178
      // Predicated region
      $region21: #{tpu_custom_call.1} parent=5 // pred_check
        _
      $region22: #{tpu_custom_call.1} parent=5 // pred_check_branch
        %181 = sbr.rel (%p178) target = $region24
      $region23: #{tpu_custom_call.1} parent=5 // pred_region
        %s182 = ssub.s32 %s19, 1
        %s183 = sand.u32 %s46, 1
        %s184 = scalar_lea.sflag [#allocation5], %s183
        %s185 = sand.u32 %s46, 1
        %s186 = smul.addr %s185, 8
        %s187 = scalar_lea.vmem [#allocation4], %s186
        // Predicated region
        $region25: #{tpu_custom_call.1} parent=23 // pred_check
          %p188 = pneg %p59
        $region26: #{tpu_custom_call.1} parent=23 // pred_check_branch
          %190 = sbr.rel (%p188) target = $region28
        $region27: #{tpu_custom_call.1} parent=23 // pred_region
          %192 = dma.done %s184, 128
        $region28: #{tpu_custom_call.1} parent=23 // pred_fallthru
          _
        %s193 = sand.u32 %s46, 1
        %s194 = scalar_lea.sflag [#allocation5], %s193
        %s195 = sand.u32 %s46, 1
        %s196 = smul.addr %s195, 8
        %s197 = scalar_lea.vmem [#allocation4], %s196
        %p198 = pneg %p59
        %p199 = pneg %p56
        %p200 = pneg %p85
        %p201 = pneg %p82
        %s202 = sand.u32 %s72, 1
        %s203 = scalar_lea.sflag [#allocation6], %s202
        %s204 = sand.u32 %s72, 1
        %s205 = scalar_lea.vmem [#allocation7], %s204
        %p206 = pneg %p111
        %p207 = pneg %p108
        %s208 = sand.u32 %s24, 1
        %s209 = scalar_lea.sflag [#allocation9], %s208
        %s210 = sand.u32 %s98, 1
        %s211 = scalar_lea.vmem [#allocation8], %s210
        %p212 = pneg %p137
        %p213 = pneg %p134
        %s214 = sand.u32 %s24, 1
        %s215 = scalar_lea.sflag [#allocation9], %s214
        %s216 = sand.u32 %s124, 1
        %s217 = scalar_lea.vmem [#allocation10], %s216
        %p218 = scmp.eq.s32.totalorder %s29, 0
        // Predicated region
        $region29: #{tpu_custom_call.1} parent=23 // pred_check
          %p219 = pneg %p218
        $region30: #{tpu_custom_call.1} parent=23 // pred_check_branch
          %221 = sbr.rel (%p219) target = $region32
        $region31: #{tpu_custom_call.1} parent=23 // pred_region
          %vm222 = vcmask 253952
          %223 = vst.msk [vmem:[#allocation2] sm:$0x1] %vm222, 0.0
          %224 = vst.msk [vmem:[#allocation3] sm:$0x1] %vm222, 0.0
        $region32: #{tpu_custom_call.1} parent=23 // pred_fallthru
          _
        %v225 = vld [vmem:[%s187] sm:$0xff]
        %vm226 = vcmask 261120
        %v227 = vsel %vm226, %v225, 0.0
        %v228 = vrot.slane %v227, 4
        %v229 = vadd.f32 %v227, %v228
        %v230 = vrot.slane %v229, 2
        %v231 = vadd.f32 %v229, %v230
        %v232 = vrot.slane %v231, 1
        %v233 = vadd.f32 %v231, %v232
        %v234 = vrcp.pop 8.0
        %v235 = vmul.f32 8.0, %v234
        %v236 = vsub.f32 1.0, %v235
        %v237 = vmul.f32 %v234, %v236
        %v238 = vadd.f32 %v234, %v237
        %vm239 = vweird.f32 %v234
        %v240 = vsel %vm239, %v234, %v238
        %v241 = vmul.f32 %v233, %v240
        %v242 = vsub.f32 %v225, %v241
        %v243 = vmul.f32 %v242, %v242
        %v244 = vsel %vm226, %v243, 0.0
        %v245 = vrot.slane %v244, 4
        %v246 = vadd.f32 %v244, %v245
        %v247 = vrot.slane %v246, 2
        %v248 = vadd.f32 %v246, %v247
        %v249 = vrot.slane %v248, 1
        %v250 = vadd.f32 %v248, %v249
        %s251 = smul.u32 %s29, 8
        %s252 = scvt.s32.f32 %s251
        %s253 = sadd.f32 %s252, 8.0
        %v254 = vld [vmem:[#allocation2] sm:$0x1]
        %v255 = vsub.f32 %v241, %v254
        %v256 = vstv %s253
        %v257 = vrcp.pop %v256
        %v258 = vmul.f32 %v256, %v257
        %v259 = vsub.f32 1.0, %v258
        %v260 = vmul.f32 %v257, %v259
        %v261 = vadd.f32 %v257, %v260
        %vm262 = vweird.f32 %v256
        %vm263 = vweird.f32 %v257
        %vm264 = vmor %vm262, %vm263
        %v265 = vsel %vm264, %v257, %v261
        %v266 = vand.u32 2147483647, %v256
        %vm267 = vcmp.eq.f32.partialorder %v266, 8.507059e+37
        %v268 = vand.u32 %v256, 2147483648
        %v269 = vor.u32 1.1754944e-38, %v268
        %v270 = vsel %vm267, %v269, %v265
        %s271 = vtos %v270
        %s272 = smul.f32 8.0, %s271
        %v273 = vstv %s272
        %v274 = vmul.f32 %v255, %v273
        %v275 = vadd.f32 %v254, %v274
        %vm276 = vcmask 253952
        %277 = vst.msk [vmem:[#allocation2] sm:$0x1] %vm276, %v275
        %v278 = vld [vmem:[#allocation3] sm:$0x1]
        %v279 = vadd.f32 %v278, %v250
        %v280 = vmul.f32 %v255, %v255
        %s281 = smul.f32 %s252, 8.0
        %v282 = vstv %s253
        %v283 = vrcp.pop %v282
        %v284 = vmul.f32 %v282, %v283
        %v285 = vsub.f32 1.0, %v284
        %v286 = vmul.f32 %v283, %v285
        %v287 = vadd.f32 %v283, %v286
        %vm288 = vweird.f32 %v282
        %vm289 = vweird.f32 %v283
        %vm290 = vmor %vm288, %vm289
        %v291 = vsel %vm290, %v283, %v287
        %v292 = vand.u32 2147483647, %v282
        %vm293 = vcmp.eq.f32.partialorder %v292, 8.507059e+37
        %v294 = vand.u32 %v282, 2147483648
        %v295 = vor.u32 1.1754944e-38, %v294
        %v296 = vsel %vm293, %v295, %v291
        %s297 = vtos %v296
        %s298 = smul.f32 %s281, %s297
        %v299 = vstv %s298
        %v300 = vmul.f32 %v280, %v299
        %v301 = vadd.f32 %v279, %v300
        %302 = vst.msk [vmem:[#allocation3] sm:$0x1] %vm276, %v301
        // Predicated region
        $region33: #{tpu_custom_call.1} parent=23 // pred_check
          %p303 = pneg %p218
        $region34: #{tpu_custom_call.1} parent=23 // pred_check_branch
          %305 = sbr.rel (%p303) target = $region36
        $region35: #{tpu_custom_call.1} parent=23 // pred_region
          %v306 = vld [vmem:[#allocation3] sm:$0x1]
          %v307 = vmul.f32 %v306, 0.125
          %v308 = vadd.f32 %v307, 1e-05
          %v309 = vrsqrt.pop %v308
          %v310 = vmul.f32 %v309, %v308
          %v311 = vmul.f32 %v310, %v309
          %v312 = vmul.f32 0.5, %v311
          %v313 = vsub.f32 1.5, %v312
          %v314 = vmul.f32 %v309, %v313
          %v315 = vmul.f32 %v308, %v314
          %vm316 = vcmp.eq.f32.partialorder %v308, inf
          %v317 = vsel %vm316, %v308, %v315
          %vm318 = vcmp.eq.f32.partialorder %v308, 0.0
          %v319 = vand.u32 %v308, 2147483648
          %v320 = vsel %vm318, %v319, %v317
          %v321 = vld [vmem:[#allocation2] sm:$0x1]
          %322 = vst.msk [vmem:[%s205] sm:$0x1] %vm276, %v321
          %323 = vst.msk [vmem:[%s211] sm:$0x1] %vm276, %v320
          %v324 = vrcp.pop %v320
          %v325 = vmul.f32 %v320, %v324
          %v326 = vsub.f32 1.0, %v325
          %v327 = vmul.f32 %v324, %v326
          %v328 = vadd.f32 %v324, %v327
          %vm329 = vweird.f32 %v320
          %vm330 = vweird.f32 %v324
          %vm331 = vmor %vm329, %vm330
          %v332 = vsel %vm331, %v324, %v328
          %v333 = vand.u32 2147483647, %v320
          %vm334 = vcmp.eq.f32.partialorder %v333, 8.507059e+37
          %v335 = vand.u32 %v320, 2147483648
          %v336 = vor.u32 1.1754944e-38, %v335
          %v337 = vsel %vm334, %v336, %v332
          %v338 = vmul.f32 1.0, %v337
          %339 = vst.msk [vmem:[%s217] sm:$0x1] %vm276, %v338
        $region36: #{tpu_custom_call.1} parent=23 // pred_fallthru
          _
        %s340 = sand.u32 %s72, 1
        %s341 = scalar_lea.sflag [#allocation6], %s340
        %s342 = sand.u32 %s72, 1
        %s343 = scalar_lea.vmem [#allocation7], %s342
        %s344 = sand.u32 %s24, 1
        %s345 = scalar_lea.sflag [#allocation9], %s344
        %s346 = sand.u32 %s98, 1
        %s347 = scalar_lea.vmem [#allocation8], %s346
        %s348 = sand.u32 %s24, 1
        %s349 = scalar_lea.sflag [#allocation9], %s348
        %s350 = sand.u32 %s124, 1
        %s351 = scalar_lea.vmem [#allocation10], %s350
        // Predicated region
        $region37: #{tpu_custom_call.1} parent=23 // pred_check
          %p352 = pneg %p82
        $region38: #{tpu_custom_call.1} parent=23 // pred_check_branch
          %354 = sbr.rel (%p352) target = $region40
        $region39: #{tpu_custom_call.1} parent=23 // pred_region
          %356 = vsyncadd %s341, 0
          %s357 = scalar_lea.hbm %s1, %s28
          %s359 = sshll.u32 %s343, 4
          %s360 = int_to_ptr.vmem [resolvable:$true] %s359
          %s361 = sshll.u32 %s357, 4
          %s362 = int_to_ptr.hbm [resolvable:$true] %s361
          %364 = dma.vmem_to_hbm [thread:$0]  %s360, 16, %s362, %s341
        $region40: #{tpu_custom_call.1} parent=23 // pred_fallthru
          _
        // Predicated region
        $region41: #{tpu_custom_call.1} parent=23 // pred_check
          %p365 = pneg %p108
        $region42: #{tpu_custom_call.1} parent=23 // pred_check_branch
          %367 = sbr.rel (%p365) target = $region44
        $region43: #{tpu_custom_call.1} parent=23 // pred_region
          %369 = vsyncadd %s345, 0
          %s370 = scalar_lea.hbm %s2, %s28
          %s372 = sshll.u32 %s347, 4
          %s373 = int_to_ptr.vmem [resolvable:$true] %s372
          %s374 = sshll.u32 %s370, 4
          %s375 = int_to_ptr.hbm [resolvable:$true] %s374
          %377 = dma.vmem_to_hbm [thread:$0]  %s373, 16, %s375, %s345
        $region44: #{tpu_custom_call.1} parent=23 // pred_fallthru
          _
        // Predicated region
        $region45: #{tpu_custom_call.1} parent=23 // pred_check
          %p378 = pneg %p134
        $region46: #{tpu_custom_call.1} parent=23 // pred_check_branch
          %380 = sbr.rel (%p378) target = $region48
        $region47: #{tpu_custom_call.1} parent=23 // pred_region
          %382 = vsyncadd %s349, 0
          %s383 = scalar_lea.hbm %s3, %s28
          %s385 = sshll.u32 %s351, 4
          %s386 = int_to_ptr.vmem [resolvable:$true] %s385
          %s387 = sshll.u32 %s383, 4
          %s388 = int_to_ptr.hbm [resolvable:$true] %s387
          %390 = dma.vmem_to_hbm [thread:$0]  %s386, 16, %s388, %s349
        $region48: #{tpu_custom_call.1} parent=23 // pred_fallthru
          _
      $region24: #{tpu_custom_call.1} parent=5 // pred_fallthru
        _
      %p391 = scmp.le.s32.totalorder 2, %s19
      // Predicated region
      $region49: #{tpu_custom_call.1} parent=5 // pred_check
        %p392 = pneg %p391
      $region50: #{tpu_custom_call.1} parent=5 // pred_check_branch
        %394 = sbr.rel (%p392) target = $region52
      $region51: #{tpu_custom_call.1} parent=5 // pred_region
        %s395 = ssub.s32 %s19, 2
        // Predicated region
        $region53: #{tpu_custom_call.1} parent=51 // pred_check
          %p396 = pneg %p88
        $region54: #{tpu_custom_call.1} parent=51 // pred_check_branch
          %398 = sbr.rel (%p396) target = $region56
        $region55: #{tpu_custom_call.1} parent=51 // pred_region
          %s399 = sand.u32 %s73, 1
          %s400 = scalar_lea.sflag [#allocation6], %s399
          %s401 = sand.u32 %s73, 1
          %s402 = scalar_lea.vmem [#allocation7], %s401
          %404 = dma.done %s400, 16
        $region56: #{tpu_custom_call.1} parent=51 // pred_fallthru
          _
        // Predicated region
        $region57: #{tpu_custom_call.1} parent=51 // pred_check
          %p405 = pneg %p114
        $region58: #{tpu_custom_call.1} parent=51 // pred_check_branch
          %407 = sbr.rel (%p405) target = $region60
        $region59: #{tpu_custom_call.1} parent=51 // pred_region
          %s408 = sand.u32 %s25, 1
          %s409 = scalar_lea.sflag [#allocation9], %s408
          %s410 = sand.u32 %s99, 1
          %s411 = scalar_lea.vmem [#allocation8], %s410
          %413 = dma.done %s409, 16
        $region60: #{tpu_custom_call.1} parent=51 // pred_fallthru
          _
        // Predicated region
        $region61: #{tpu_custom_call.1} parent=51 // pred_check
          %p414 = pneg %p140
        $region62: #{tpu_custom_call.1} parent=51 // pred_check_branch
          %416 = sbr.rel (%p414) target = $region64
        $region63: #{tpu_custom_call.1} parent=51 // pred_region
          %s417 = sand.u32 %s25, 1
          %s418 = scalar_lea.sflag [#allocation9], %s417
          %s419 = sand.u32 %s125, 1
          %s420 = scalar_lea.vmem [#allocation10], %s419
          %422 = dma.done %s418, 16
        $region64: #{tpu_custom_call.1} parent=51 // pred_fallthru
          _
      $region52: #{tpu_custom_call.1} parent=5 // pred_fallthru
        _
    $region6: #{tpu_custom_call.1} parent=1 // loop_footer
      %s23 = sadd.s32 1, %s19
    $region7: #{tpu_custom_call.1} parent=1 // loop_footer_branch
      %18 = sbr.rel target = $region3
    $region8: #{tpu_custom_call.1} parent=1 // loop_exit
      _
    %423 = vsyncpa [#allocation5], 1
    %s424 = scalar_lea.sflag [#allocation5], 1
    %425 = vsyncpa %s424, 1
    %426 = vsyncpa [#allocation6], 1
    %s427 = scalar_lea.sflag [#allocation6], 1
    %428 = vsyncpa %s427, 1
    %429 = vsyncpa [#allocation9], 1
    %s430 = scalar_lea.sflag [#allocation9], 1
    %431 = vsyncpa %s430, 1

</llo_original>
